<compile_context>
chip_gen: v6e
topology: v6e:2x2x1
jax: 0.10.0
libtpu: 0.0.40
codegen_flags: <defaults>
</compile_context>

<pallas_src>
import functools

import jax
import jax.numpy as jnp
import numpy as np
from jax import lax
from jax.experimental import pallas as pl
from jax.experimental.pallas import tpu as pltpu


def _round_up(x, m):
    return (x + m - 1) // m * m


def _int_pow(x, n):
    """x ** n for small non-negative integer n, without transcendentals."""
    n = int(n)
    if n == 0:
        return jnp.ones_like(x)
    acc = None
    base = x
    while n:
        if n & 1:
            acc = base if acc is None else acc * base
        n >>= 1
        if n:
            base = base * base
    return acc


def _pow(x, g):
    fg = float(g)
    if fg.is_integer() and 0 <= fg <= 16:
        return _int_pow(x, int(fg))
    return x ** fg


# ----------------------------- kernels ------------------------------------- #

def _focal_kernel(x_ref, t_ref, o_ref, *, gamma):
    """Per-row focal loss: -(1 - p_t)**gamma * log_softmax(x)[target]."""
    x = x_ref[...].astype(jnp.float32)                       # [TB, C]
    tgt = t_ref[...]                                         # [TB, 1] int32
    tb, c = x.shape

    m = jnp.max(x, axis=1, keepdims=True)                    # [TB, 1]
    z = x - m
    e = jnp.exp(z)
    log_s = jnp.log(jnp.sum(e, axis=1, keepdims=True))       # [TB, 1]  (B logs total)

    col = lax.broadcasted_iota(jnp.int32, (tb, c), 1)
    onehot = col == tgt                                      # [TB, C] bool
    z_t = jnp.sum(jnp.where(onehot, z, 0.0), axis=1, keepdims=True)

    logpt = z_t - log_s                                      # [TB, 1]
    pt = jnp.exp(logpt)
    o_ref[...] = -_pow(1.0 - pt, gamma) * logpt


def _asymmetric_kernel(x_ref, t_ref, o_ref, *, gamma_pos, gamma_neg):
    """Per-row asymmetric loss, faithful to the reference formula."""
    x = x_ref[...].astype(jnp.float32)                       # [TB, C]
    tgt = t_ref[...]                                         # [TB, 1]
    tb, c = x.shape

    m = jnp.max(x, axis=1, keepdims=True)
    e = jnp.exp(x - m)
    s = jnp.sum(e, axis=1, keepdims=True)
    probs = e / s                                            # softmax, [TB, C]

    col = lax.broadcasted_iota(jnp.int32, (tb, c), 1)
    onehot = col == tgt

    p_t = jnp.sum(jnp.where(onehot, probs, 0.0), axis=1, keepdims=True)
    p_neg = jnp.sum(jnp.where(onehot, 0.0, probs), axis=1, keepdims=True)
    p_sum = jnp.sum(probs, axis=1, keepdims=True)

    loss_pos = -_pow(1.0 - p_t, gamma_pos) * jnp.log(p_t)
    # Faithful to the reference: log(1 - probs.sum(dim=1)) is log(~0) by
    # construction, so this term is typically -inf/NaN, exactly like PyTorch.
    loss_neg = -_pow(p_neg, gamma_neg) * jnp.log(1.0 - p_sum)
    o_ref[...] = loss_pos + loss_neg


# ----------------------------- wrappers ------------------------------------ #

def _per_row_loss(kernel, inputs, targets, *, block_b=128):
    B, C = inputs.shape
    tb = min(_round_up(B, 8), _round_up(block_b, 8))
    b_pad = _round_up(B, tb)
    g = b_pad // tb

    x = jnp.asarray(inputs, jnp.float32)
    t = jnp.asarray(targets, jnp.int32).reshape(B, 1)
    if b_pad != B:
        x = jnp.pad(x, ((0, b_pad - B), (0, 0)))
        t = jnp.pad(t, ((0, b_pad - B), (0, 0)))

    per_row = pl.pallas_call(
        kernel,
        out_shape=jax.ShapeDtypeStruct((b_pad, 1), jnp.float32),
        grid=(g,),
        in_specs=[
            pl.BlockSpec((tb, C), lambda i: (i, 0)),
            pl.BlockSpec((tb, 1), lambda i: (i, 0)),
        ],
        out_specs=pl.BlockSpec((tb, 1), lambda i: (i, 0)),
        compiler_params=pltpu.CompilerParams(
            dimension_semantics=("parallel",)),
    )(x, t)

    # reduction='mean' over the true (unpadded) batch.
    return jnp.sum(per_row[:B, 0]) / B


def focal_loss(inputs, targets, gamma=2.0, block_b=128):
    return _per_row_loss(
        functools.partial(_focal_kernel, gamma=float(gamma)),
        inputs, targets, block_b=block_b)


def asymmetric_loss(inputs, targets, gamma_pos=1.0, gamma_neg=4.0, block_b=128):
    return _per_row_loss(
        functools.partial(_asymmetric_kernel,
                          gamma_pos=float(gamma_pos),
                          gamma_neg=float(gamma_neg)),
        inputs, targets, block_b=block_b)


def loss_forward(outputs, targets, loss_type="focal"):
    """Mirror of Loss.forward (default loss_type='focal')."""
    if loss_type == "focal":
        return focal_loss(outputs, targets, gamma=2.0)
    elif loss_type == "asymmetric":
        return asymmetric_loss(outputs, targets, gamma_pos=1.0, gamma_neg=4.0)
    raise ValueError("Unsupported loss type.")


# ----------------------------- reference / test ----------------------------- #

def _focal_ref(inputs, targets, gamma=2.0):
    logsm = jax.nn.log_softmax(inputs.astype(jnp.float32), axis=1)
    logpt = jnp.take_along_axis(
        logsm, targets[:, None].astype(jnp.int32), axis=1)[:, 0]
    pt = jnp.exp(logpt)
    return jnp.mean(-((1.0 - pt) ** gamma) * logpt)


if __name__ == "__main__":
    key = jax.random.PRNGKey(0)
    k_x, k_t = jax.random.split(key)
    B, C = 8, 32
    logits = jax.random.normal(k_x, (B, C), dtype=jnp.float32)
    targets = jax.random.randint(k_t, (B,), 0, C, dtype=jnp.int32)

    # Default path of the module: Loss() -> FocalLoss(gamma=2).
    out = jax.block_until_ready(loss_forward(logits, targets, loss_type="focal"))
    ref = jax.block_until_ready(_focal_ref(logits, targets, gamma=2.0))
    assert np.isfinite(np.asarray(out)), out
    assert np.allclose(np.asarray(out), np.asarray(ref), rtol=1e-4, atol=1e-5), (out, ref)

    # Non-default branch of the module: just ensure it compiles and runs.  Its
    # reference math contains log(1 - softmax(x).sum()), which is -inf/NaN by
    # construction; the kernel reproduces that faithfully, so no finite check.
    out_asym = jax.block_until_ready(
        loss_forward(logits, targets, loss_type="asymmetric"))

    print("KERNEL_OK")
</pallas_src>

<mosaic_0001>
module attributes {stable_mosaic.version = 11 : i64} {
  func.func @_focal_kernel(%arg0: i32, %arg1: memref<8x32xf32, #tpu.memory_space<vmem>>, %arg2: memref<8x1xi32, #tpu.memory_space<vmem>>, %arg3: memref<8x1xf32, #tpu.memory_space<vmem>>) attributes {dimension_semantics = [#tpu.dimension_semantics<parallel>], iteration_bounds = array<i64: 1>, scalar_prefetch = 0 : i64, scratch_operands = 0 : i64, tpu.core_type = #tpu.core_type<tc>, window_params = [{transform_indices = @transform_0, window_bounds = array<i64: 8, 32>}, {transform_indices = @transform_1, window_bounds = array<i64: 8, 1>}, {transform_indices = @transform_2, window_bounds = array<i64: 8, 1>}]} {
    %c0 = arith.constant 0 : index
    %c0_0 = arith.constant 0 : index
    %0 = vector.load %arg1[%c0, %c0_0] : memref<8x32xf32, #tpu.memory_space<vmem>>, vector<8x32xf32>
    %c0_1 = arith.constant 0 : index
    %c0_2 = arith.constant 0 : index
    %1 = vector.load %arg2[%c0_1, %c0_2] : memref<8x1xi32, #tpu.memory_space<vmem>>, vector<8x1xi32>
    %cst = arith.constant dense<0xFF800000> : vector<8xf32>
    %2 = vector.multi_reduction <maximumf>, %0, %cst [1] : vector<8x32xf32> to vector<8xf32>
    %3 = vector.shape_cast %2 : vector<8xf32> to vector<8x1xf32>
    %4 = vector.broadcast %3 : vector<8x1xf32> to vector<8x32xf32>
    %5 = arith.subf %0, %4 : vector<8x32xf32>
    %6 = math.exp %5 : vector<8x32xf32>
    %cst_3 = arith.constant dense<0.000000e+00> : vector<8xf32>
    %7 = vector.multi_reduction <add>, %6, %cst_3 [1] : vector<8x32xf32> to vector<8xf32>
    %8 = vector.shape_cast %7 : vector<8xf32> to vector<8x1xf32>
    %9 = math.log %8 : vector<8x1xf32>
    %10 = tpu.iota {dimensions = array<i32: 1>} : vector<8x32xi32>
    %11 = vector.broadcast %1 : vector<8x1xi32> to vector<8x32xi32>
    %12 = arith.cmpi eq, %10, %11 : vector<8x32xi32>
    %cst_4 = arith.constant 0.000000e+00 : f32
    %13 = vector.broadcast %cst_4 : f32 to vector<8x32xf32>
    %14 = arith.select %12, %5, %13 : vector<8x32xi1>, vector<8x32xf32>
    %cst_5 = arith.constant dense<0.000000e+00> : vector<8xf32>
    %15 = vector.multi_reduction <add>, %14, %cst_5 [1] : vector<8x32xf32> to vector<8xf32>
    %16 = vector.shape_cast %15 : vector<8xf32> to vector<8x1xf32>
    %17 = arith.subf %16, %9 : vector<8x1xf32>
    %18 = math.exp %17 : vector<8x1xf32>
    %cst_6 = arith.constant 1.000000e+00 : f32
    %19 = vector.broadcast %cst_6 : f32 to vector<8x1xf32>
    %20 = arith.subf %19, %18 : vector<8x1xf32>
    %21 = arith.mulf %20, %20 : vector<8x1xf32>
    %cst_7 = arith.constant 0.000000e+00 : f32
    %22 = vector.broadcast %cst_7 : f32 to vector<8x1xf32>
    %23 = arith.subf %22, %21 : vector<8x1xf32>
    %24 = arith.mulf %23, %17 : vector<8x1xf32>
    %c0_8 = arith.constant 0 : index
    %c0_9 = arith.constant 0 : index
    %25 = vector.load %arg3[%c0_8, %c0_9] : memref<8x1xf32, #tpu.memory_space<vmem>>, vector<8x1xf32>
    tpu.vector_store %arg3[%c0_8, %c0_9], %24 {strides = array<i32>} : memref<8x1xf32, #tpu.memory_space<vmem>>, vector<8x1xf32>,
    return
  }
  func.func @transform_0(%arg0: i32) -> (i32, i32) {
    %c0_i32 = arith.constant 0 : i32
    %c0_i32_0 = arith.constant 0 : i32
    return %arg0, %c0_i32 : i32, i32
  }
  func.func @transform_1(%arg0: i32) -> (i32, i32) {
    %c0_i32 = arith.constant 0 : i32
    %c0_i32_0 = arith.constant 0 : i32
    return %arg0, %c0_i32 : i32, i32
  }
  func.func @transform_2(%arg0: i32) -> (i32, i32) {
    %c0_i32 = arith.constant 0 : i32
    %c0_i32_0 = arith.constant 0 : i32
    return %arg0, %c0_i32 : i32, i32
  }
}

</mosaic_0001>

<llo_original>
// kernel: tpu_custom_call.1
$region0: #{tpu_custom_call.1}
  #allocation0 [shape = 'u32[]', space=smem, size = 0x4, offset = 0x4, fixed_abs, tag = 'smem constant byte address 0x4 - core index']
  #allocation1 [shape = 'u32[144,128]{1,0:T(1,128)}', space=vmem, size = 0x12000, scoped, tag = 'internal scratch']
  %s0 = inlined_call_operand.vmem [shape: f32[8,32], index: 0, kind: input, shape index: {}]
  %s1 = inlined_call_operand.vmem [shape: s32[8,1], index: 1, kind: input, shape index: {}]
  %s2 = inlined_call_operand.vmem [shape: f32[8,1], index: 2, kind: output, shape index: {}]
  %s3 = sld [smem:[#allocation0]]
  $region18: #{tpu_custom_call.1} parent=0
    _
  %s5 = ssub.s32 1, %s3
  %s6 = scalar_select 0, %s5, %s3
  // Predicated region
  $region2: #{tpu_custom_call.1} parent=0 // pred_check
    _
  $region3: #{tpu_custom_call.1} parent=0 // pred_check_branch
    %8 = sbr.rel (0) target = $region5
  $region4: #{tpu_custom_call.1} parent=0 // pred_region
    _
  $region5: #{tpu_custom_call.1} parent=0 // pred_fallthru
    _
  // Predicated region
  $region6: #{tpu_custom_call.1} parent=0 // pred_check
    _
  $region7: #{tpu_custom_call.1} parent=0 // pred_check_branch
    %10 = sbr.rel (0) target = $region9
  $region8: #{tpu_custom_call.1} parent=0 // pred_region
    _
  $region9: #{tpu_custom_call.1} parent=0 // pred_fallthru
    _
  %v11 = vld [vmem:[%s0] sm:$0xff]
  %v12 = vld [vmem:[%s1] sm:$0xff]
  %vm13 = vcmask 261120
  %v14 = vsel %vm13, %v11, -inf
  %15 = vmax.xlane.f32.xlu0 %v14
  %v16 = vpop.xlane.xlu0 %15
  %v17 = vsub.f32 %v11, %v16
  %v18 = vmul.f32 %v17, 1.442695
  %v19 = vpow.pop %v18
  %v20 = vsel %vm13, %v19, 0.0
  %21 = vadd.xlane.f32.xlu0 %v20
  %v22 = vpop.xlane.xlu0 %21
  %v23 = vlog2.pop %v22
  %v24 = vmul.f32 %v23, 0.6931472
  %v25 = vlaneseq
  %v26 = vand.u32 %v25, 127
  %27 = vset.pattern.permute.xlu0 0
  %28 = vperm.xlu0 %27, %v12
  %v29 = vpop.permute.xlu0 %28
  %vm30 = vcmp.eq.s32.totalorder %v26, %v29
  %v31 = vsel %vm30, %v17, 0.0
  %v32 = vsel %vm13, %v31, 0.0
  %33 = vadd.xlane.f32.xlu0 %v32
  %v34 = vpop.xlane.xlu0 %33
  %v35 = vsub.f32 %v34, %v24
  %v36 = vmul.f32 %v35, 1.442695
  %v37 = vpow.pop %v36
  %v38 = vsub.f32 1.0, %v37
  %v39 = vmul.f32 %v38, %v38
  %v40 = vsub.f32 0.0, %v39
  %v41 = vmul.f32 %v40, %v35
  %vm42 = vcmask 7168
  %43 = vst.msk [vmem:[%s2] sm:$0xff] %vm42, %v41
  // Predicated region
  $region10: #{tpu_custom_call.1} parent=0 // pred_check
    _
  $region11: #{tpu_custom_call.1} parent=0 // pred_check_branch
    %45 = sbr.rel (0) target = $region13
  $region12: #{tpu_custom_call.1} parent=0 // pred_region
    _
  $region13: #{tpu_custom_call.1} parent=0 // pred_fallthru
    _
  // Predicated region
  $region14: #{tpu_custom_call.1} parent=0 // pred_check
    _
  $region15: #{tpu_custom_call.1} parent=0 // pred_check_branch
    %47 = sbr.rel (0) target = $region17
  $region16: #{tpu_custom_call.1} parent=0 // pred_region
    _
  $region17: #{tpu_custom_call.1} parent=0 // pred_fallthru
    _

</llo_original>
